<compile_context>
chip_gen: v7x
topology: tpu7x:2x2x1
jax: 0.10.0
libtpu: 0.0.40
codegen_flags: <defaults>
</compile_context>

<pallas_src>
import functools
import math

import jax
import jax.numpy as jnp
from jax.experimental import pallas as pl
from jax.experimental.pallas import tpu as pltpu

_LOG2E = math.log2(math.e)


def _round_up(x, m):
    return ((x + m - 1) // m) * m


def _lane_bcast(x, n):
    """Broadcast a lane-replicated (..., L) array to (..., n) lanes."""
    w = x.shape[-1]
    if n == w:
        return x
    if n % w == 0:
        return jnp.tile(x, (1, 1, n // w))
    if n < w:
        return x[:, :, :n]            # values are replicated; any n lanes work
    return jnp.broadcast_to(x[:, :, :1], x.shape[:-1] + (n,))


def _flash_attn_kernel(q_ref, k_ref, v_ref, o_ref, q_sc, m_sc, l_sc, acc_sc, *,
                       scale_log2e, kv_len, block_kv, need_kv_mask,
                       matmul_dtype, exp_dtype):
    kv = pl.program_id(2)

    @pl.when(kv == 0)
    def _():
        # Hoist the scale fold (incl. log2e for the exp2 softmax) and the
        # matmul-dtype cast out of the KV loop: the q block is resident
        # across the whole reduction axis.
        q_sc[...] = (q_ref[...] * scale_log2e).astype(q_sc.dtype)
        m_sc[...] = jnp.full(m_sc.shape, -jnp.inf, m_sc.dtype)
        l_sc[...] = jnp.zeros(l_sc.shape, l_sc.dtype)
        acc_sc[...] = jnp.zeros(acc_sc.shape, acc_sc.dtype)

    q = q_sc[...]                              # (T, tq, D) in matmul dtype
    k = k_ref[...].astype(matmul_dtype)        # (T, tk, D)

    # Scores in the base-2 log domain (scale * log2(e) already folded into q);
    # bf16 operands, f32 accumulation on the MXU.
    s = jnp.einsum("bqd,bkd->bqk", q, k, preferred_element_type=jnp.float32)

    if need_kv_mask:
        kv_pos = kv * block_kv + jax.lax.broadcasted_iota(jnp.int32, s.shape, 2)
        s = jnp.where(kv_pos < kv_len, s, -jnp.inf)

    # Online softmax update; statistics are lane-replicated (width 128), f32.
    m_prev = m_sc[...]
    m_cur = jnp.max(s, axis=-1, keepdims=True)
    m_next = jnp.maximum(m_prev, m_cur)
    alpha = jnp.exp2(m_prev - m_next)

    # Softmax exponent on the EUP; bf16 on chips with a bf16 EUP path.
    p = jnp.exp2((s - _lane_bcast(m_next, s.shape[-1])).astype(exp_dtype))

    # l / acc accumulation stays in f32 regardless of the exponent dtype.
    l_sc[...] = alpha * l_sc[...] + jnp.sum(
        p, axis=-1, keepdims=True, dtype=jnp.float32)
    acc_sc[...] = _lane_bcast(alpha, acc_sc.shape[-1]) * acc_sc[...] + jnp.einsum(
        "bqk,bkd->bqd", p.astype(matmul_dtype), v_ref[...].astype(matmul_dtype),
        preferred_element_type=jnp.float32)
    m_sc[...] = m_next

    @pl.when(kv == pl.num_programs(2) - 1)
    def _():
        # Deferred normalisation: one reciprocal on the EUP + a (tq, D) mul.
        inv_l = pl.reciprocal(l_sc[...], approx=True)
        o_ref[...] = (acc_sc[...] * _lane_bcast(inv_l, o_ref.shape[-1])).astype(
            o_ref.dtype)


def _tpu_generation():
    try:
        kind = jax.devices()[0].device_kind.lower()
    except Exception:
        return None
    for g in (7, 6, 5, 4, 3, 2):
        if (f"v{g}" in kind) or (f"{g}x" in kind) or (f"{g}e" in kind) or (f"{g}p" in kind):
            return g
    return None


def _chip_params():
    gen = _tpu_generation()
    if gen is not None and gen >= 7:
        # v7x: highest HBM BW but only 64 MiB VMEM per TC -> grow tq, cap VMEM.
        return dict(cap_q=1024, cap_k=512, vmem_budget=32 << 20,
                    vmem_limit=48 << 20, exp_bf16=True)
    if gen == 6:
        # v6e: 128 MiB VMEM; needs tq ~1024 to stay MXU-bound on long KV.
        return dict(cap_q=1024, cap_k=512, vmem_budget=56 << 20,
                    vmem_limit=96 << 20, exp_bf16=True)
    if gen is not None and gen <= 5:
        # v5e and older: compute-bound already at tq=512; no bf16 EUP/VPU.
        return dict(cap_q=512, cap_k=512, vmem_budget=48 << 20,
                    vmem_limit=80 << 20, exp_bf16=False)
    # Unknown chip: conservative (v7x-safe) settings.
    return dict(cap_q=512, cap_k=512, vmem_budget=28 << 20,
                vmem_limit=48 << 20, exp_bf16=False)


def _per_head_vmem_bytes(tq, tk, d, in_itemsize, mm_itemsize):
    """VMEM bytes per (batch, head) slice of one grid step, lane-padding aware."""
    d_pad = _round_up(d, 128)
    # Double-buffered BlockSpec tiles: q, o (tq x D) and k, v (tk x D).
    io = 2 * (2 * tq * d_pad + 2 * tk * d_pad) * in_itemsize
    # Scratch: scaled-q copy, lane-padded m/l statistics, f32 accumulator.
    scratch = tq * d_pad * mm_itemsize + 2 * tq * 128 * 4 + tq * d_pad * 4
    # Live (tq, tk) intermediates (scores / exponent / probabilities).
    interm = 3 * tq * tk * 4
    return io + scratch + interm


def _pick_head_tile(bh, q_blocks, per_head_bytes, budget, cap=512):
    """Largest divisor T of bh fitting the VMEM budget, while keeping >= 2
    parallel grid steps across the (head, query) axes when possible."""
    best = 1
    for t in range(1, min(bh, cap) + 1):
        if bh % t:
            continue
        if (bh // t) * q_blocks < 2 and bh * q_blocks >= 2:
            continue
        if t * per_head_bytes <= budget:
            best = t
    return best


class Attn:
    """JAX/Pallas port of the PyTorch Attn module (non-causal SDPA)."""

    def __init__(self, head_dim, use_flash_attention):
        self.head_dim = head_dim
        self.use_flash_attention = use_flash_attention

    def __call__(self, q, k, v):
        assert q.ndim == 4 and k.ndim == 4 and v.ndim == 4
        assert k.shape == v.shape and q.shape[:2] == k.shape[:2]
        assert q.shape[-1] == k.shape[-1]
        B, H, Sq, D = q.shape
        Skv = k.shape[2]

        # PyTorch: flash path scales by 1/sqrt(q.shape[-1]); the explicit path
        # by 1/sqrt(self.head_dim).  log2(e) is folded in so the kernel uses
        # exp2 directly (removes a per-element multiply on every exponent).
        scale = 1.0 / math.sqrt(D if self.use_flash_attention else self.head_dim)
        scale_log2e = scale * _LOG2E

        params = _chip_params()
        # bf16 operands for both matmuls (f32 accumulation on the MXU).
        matmul_dtype = jnp.bfloat16 if q.dtype == jnp.float32 else q.dtype
        exp_dtype = jnp.bfloat16 if params["exp_bf16"] else jnp.float32

        BH = B * H
        qf = q.reshape(BH, Sq, D)
        kf = k.reshape(BH, Skv, D)
        vf = v.reshape(BH, Skv, D)

        # tq multiple of 8 (sublane dim); tk multiple of 128 so the (tq, tk)
        # score tile is lane-dense and the MXU N dimension is filled.
        tq = min(params["cap_q"], _round_up(Sq, 8))
        tk = min(params["cap_k"], _round_up(Skv, 128))

        in_itemsize = q.dtype.itemsize
        mm_itemsize = jnp.dtype(matmul_dtype).itemsize
        # Shrink tiles until a single head fits the per-generation VMEM budget.
        while (_per_head_vmem_bytes(tq, tk, D, in_itemsize, mm_itemsize)
               > params["vmem_budget"]) and (tq > 8 or tk > 128):
            if tk > 128:
                tk = max(128, (tk // 256) * 128)
            else:
                tq = max(8, (tq // 16) * 8)

        Sq_pad = _round_up(Sq, tq)
        Skv_pad = _round_up(Skv, tk)
        need_kv_mask = Skv_pad != Skv

        if Sq_pad != Sq:
            qf = jnp.pad(qf, ((0, 0), (0, Sq_pad - Sq), (0, 0)))
        if Skv_pad != Skv:
            kf = jnp.pad(kf, ((0, 0), (0, Skv_pad - Skv), (0, 0)))
            vf = jnp.pad(vf, ((0, 0), (0, Skv_pad - Skv), (0, 0)))

        per_head = _per_head_vmem_bytes(tq, tk, D, in_itemsize, mm_itemsize)
        t_heads = _pick_head_tile(BH, Sq_pad // tq, per_head,
                                  params["vmem_budget"])

        grid = (BH // t_heads, Sq_pad // tq, Skv_pad // tk)

        kernel = functools.partial(
            _flash_attn_kernel,
            scale_log2e=scale_log2e,
            kv_len=Skv,
            block_kv=tk,
            need_kv_mask=need_kv_mask,
            matmul_dtype=matmul_dtype,
            exp_dtype=exp_dtype,
        )

        q_spec = pl.BlockSpec((t_heads, tq, D), lambda b, qi, ki: (b, qi, 0))
        kv_spec = pl.BlockSpec((t_heads, tk, D), lambda b, qi, ki: (b, ki, 0))
        o_spec = pl.BlockSpec((t_heads, tq, D), lambda b, qi, ki: (b, qi, 0))

        out = pl.pallas_call(
            kernel,
            out_shape=jax.ShapeDtypeStruct((BH, Sq_pad, D), q.dtype),
            grid_spec=pltpu.PrefetchScalarGridSpec(
                num_scalar_prefetch=0,
                grid=grid,
                in_specs=[q_spec, kv_spec, kv_spec],
                out_specs=o_spec,
                scratch_shapes=[
                    pltpu.VMEM((t_heads, tq, D), matmul_dtype),    # scaled q
                    pltpu.VMEM((t_heads, tq, 128), jnp.float32),   # running max m
                    pltpu.VMEM((t_heads, tq, 128), jnp.float32),   # running sum l
                    pltpu.VMEM((t_heads, tq, D), jnp.float32),     # output acc
                ],
            ),
            compiler_params=pltpu.CompilerParams(
                dimension_semantics=("parallel", "parallel", "arbitrary"),
                vmem_limit_bytes=params["vmem_limit"],
            ),
        )(qf, kf, vf)

        if Sq_pad != Sq:
            out = out[:, :Sq, :]
        return out.reshape(B, H, Sq, D)


def _reference_attn(q, k, v, scale):
    s = jnp.einsum("bhqd,bhkd->bhqk", q.astype(jnp.float32),
                   k.astype(jnp.float32),
                   precision=jax.lax.Precision.HIGHEST) * scale
    p = jax.nn.softmax(s, axis=-1)
    return jnp.einsum("bhqk,bhkd->bhqd", p, v.astype(jnp.float32),
                      precision=jax.lax.Precision.HIGHEST).astype(q.dtype)


def _check(out, ref):
    err = float(jnp.max(jnp.abs(out.astype(jnp.float32) - ref.astype(jnp.float32))))
    # bf16 MXU operands + bf16/exp2 softmax exponent + approx reciprocal give a
    # few 1e-3..1e-2 of error vs. the strict-f32 reference.
    assert jnp.allclose(out, ref, atol=3e-2, rtol=3e-2), (
        f"mismatch vs reference, max err {err}")


if __name__ == "__main__":
    key = jax.random.PRNGKey(0)

    # Small shapes consistent with the module.
    B, H, S, D = 2, 4, 8, 32
    kq, kk, kv_ = jax.random.split(key, 3)
    q = jax.random.normal(kq, (B, H, S, D), dtype=jnp.float32)
    k = jax.random.normal(kk, (B, H, S, D), dtype=jnp.float32)
    v = jax.random.normal(kv_, (B, H, S, D), dtype=jnp.float32)

    attn = Attn(head_dim=D, use_flash_attention=False)
    out = jax.block_until_ready(attn(q, k, v))
    assert out.shape == (B, H, S, D)
    _check(out, _reference_attn(q, k, v, 1.0 / math.sqrt(D)))

    # Secondary check: longer sequence exercises multiple KV steps, the online
    # softmax rescale, KV padding/masking, and the flash-attention scale path.
    B2, H2, S2, D2 = 1, 2, 640, 32
    kq2, kk2, kv2 = jax.random.split(jax.random.PRNGKey(1), 3)
    q2 = jax.random.normal(kq2, (B2, H2, S2, D2), dtype=jnp.float32)
    k2 = jax.random.normal(kk2, (B2, H2, S2, D2), dtype=jnp.float32)
    v2 = jax.random.normal(kv2, (B2, H2, S2, D2), dtype=jnp.float32)

    attn2 = Attn(head_dim=D2, use_flash_attention=True)
    out2 = jax.block_until_ready(attn2(q2, k2, v2))
    assert out2.shape == (B2, H2, S2, D2)
    _check(out2, _reference_attn(q2, k2, v2, 1.0 / math.sqrt(D2)))

    print("KERNEL_OK")
</pallas_src>

<mosaic_0001>
module attributes {stable_mosaic.version = 11 : i64} {
  func.func @_flash_attn_kernel(%arg0: i32, %arg1: i32, %arg2: i32, %arg3: memref<4x8x32xf32, #tpu.memory_space<vmem>>, %arg4: memref<4x128x32xf32, #tpu.memory_space<vmem>>, %arg5: memref<4x128x32xf32, #tpu.memory_space<vmem>>, %arg6: memref<4x8x32xf32, #tpu.memory_space<vmem>>, %arg7: memref<4x8x32xbf16, #tpu.memory_space<vmem>>, %arg8: memref<4x8x128xf32, #tpu.memory_space<vmem>>, %arg9: memref<4x8x128xf32, #tpu.memory_space<vmem>>, %arg10: memref<4x8x32xf32, #tpu.memory_space<vmem>>) attributes {dimension_semantics = [#tpu.dimension_semantics<parallel>, #tpu.dimension_semantics<parallel>, #tpu.dimension_semantics<arbitrary>], iteration_bounds = array<i64: 2, 1, 1>, scalar_prefetch = 0 : i64, scratch_operands = 4 : i64, tpu.core_type = #tpu.core_type<tc>, window_params = [{transform_indices = @transform_0, window_bounds = array<i64: 4, 8, 32>}, {transform_indices = @transform_1, window_bounds = array<i64: 4, 128, 32>}, {transform_indices = @transform_2, window_bounds = array<i64: 4, 128, 32>}, {transform_indices = @transform_3, window_bounds = array<i64: 4, 8, 32>}]} {
    %c0_i32 = arith.constant 0 : i32
    %0 = arith.cmpi eq, %arg2, %c0_i32 : i32
    %1 = arith.extui %0 : i1 to i32
    %c0_i32_0 = arith.constant 0 : i32
    %2 = arith.cmpi ne, %1, %c0_i32_0 : i32
    scf.if %2 {
      %c0_33 = arith.constant 0 : index
      %c0_34 = arith.constant 0 : index
      %c0_35 = arith.constant 0 : index
      %44 = vector.load %arg3[%c0_33, %c0_34, %c0_35] : memref<4x8x32xf32, #tpu.memory_space<vmem>>, vector<4x8x32xf32>
      %cst_36 = arith.constant 0.255034864 : f32
      %45 = vector.broadcast %cst_36 : f32 to vector<4x8x32xf32>
      %46 = arith.mulf %44, %45 : vector<4x8x32xf32>
      %47 = arith.truncf %46 : vector<4x8x32xf32> to vector<4x8x32xbf16>
      %c0_37 = arith.constant 0 : index
      %c0_38 = arith.constant 0 : index
      %c0_39 = arith.constant 0 : index
      %48 = vector.load %arg7[%c0_37, %c0_38, %c0_39] : memref<4x8x32xbf16, #tpu.memory_space<vmem>>, vector<4x8x32xbf16>
      tpu.vector_store %arg7[%c0_37, %c0_38, %c0_39], %47 {strides = array<i32>} : memref<4x8x32xbf16, #tpu.memory_space<vmem>>, vector<4x8x32xbf16>,
      %cst_40 = arith.constant 0xFF800000 : f32
      %49 = vector.broadcast %cst_40 : f32 to vector<4x8x128xf32>
      %c0_41 = arith.constant 0 : index
      %c0_42 = arith.constant 0 : index
      %c0_43 = arith.constant 0 : index
      %50 = vector.load %arg8[%c0_41, %c0_42, %c0_43] : memref<4x8x128xf32, #tpu.memory_space<vmem>>, vector<4x8x128xf32>
      tpu.vector_store %arg8[%c0_41, %c0_42, %c0_43], %49 {strides = array<i32>} : memref<4x8x128xf32, #tpu.memory_space<vmem>>, vector<4x8x128xf32>,
      %cst_44 = arith.constant 0.000000e+00 : f32
      %51 = vector.broadcast %cst_44 : f32 to vector<4x8x128xf32>
      %c0_45 = arith.constant 0 : index
      %c0_46 = arith.constant 0 : index
      %c0_47 = arith.constant 0 : index
      %52 = vector.load %arg9[%c0_45, %c0_46, %c0_47] : memref<4x8x128xf32, #tpu.memory_space<vmem>>, vector<4x8x128xf32>
      tpu.vector_store %arg9[%c0_45, %c0_46, %c0_47], %51 {strides = array<i32>} : memref<4x8x128xf32, #tpu.memory_space<vmem>>, vector<4x8x128xf32>,
      %cst_48 = arith.constant 0.000000e+00 : f32
      %53 = vector.broadcast %cst_48 : f32 to vector<4x8x32xf32>
      %c0_49 = arith.constant 0 : index
      %c0_50 = arith.constant 0 : index
      %c0_51 = arith.constant 0 : index
      %54 = vector.load %arg10[%c0_49, %c0_50, %c0_51] : memref<4x8x32xf32, #tpu.memory_space<vmem>>, vector<4x8x32xf32>
      tpu.vector_store %arg10[%c0_49, %c0_50, %c0_51], %53 {strides = array<i32>} : memref<4x8x32xf32, #tpu.memory_space<vmem>>, vector<4x8x32xf32>,
    } else {
    }
    %c0 = arith.constant 0 : index
    %c0_1 = arith.constant 0 : index
    %c0_2 = arith.constant 0 : index
    %3 = vector.load %arg7[%c0, %c0_1, %c0_2] : memref<4x8x32xbf16, #tpu.memory_space<vmem>>, vector<4x8x32xbf16>
    %c0_3 = arith.constant 0 : index
    %c0_4 = arith.constant 0 : index
    %c0_5 = arith.constant 0 : index
    %4 = vector.load %arg4[%c0_3, %c0_4, %c0_5] : memref<4x128x32xf32, #tpu.memory_space<vmem>>, vector<4x128x32xf32>
    %5 = arith.truncf %4 : vector<4x128x32xf32> to vector<4x128x32xbf16>
    "tpu.trace_start"() <{level = 10 : i32, message = "bqd,bkd->bqk"}> : () -> ()
    %cst = arith.constant dense<0.000000e+00> : vector<4x8x128xf32>
    %6 = tpu.matmul %3, %5, %cst {dimension_numbers = #tpu.dot_dimension_numbers<[2], [2], [1], [1], [0, 0, 0, 1, 1, 1], [0], [0]>} : vector<4x8x32xbf16>, vector<4x128x32xbf16>, vector<4x8x128xf32> -> vector<4x8x128xf32>
    "tpu.trace_stop"() : () -> ()
    %c128_i32 = arith.constant 128 : i32
    %7 = arith.muli %arg2, %c128_i32 : i32
    %8 = tpu.iota {dimensions = array<i32: 2>} : vector<4x8x128xi32>
    %9 = vector.broadcast %7 : i32 to vector<4x8x128xi32>
    %10 = arith.addi %9, %8 : vector<4x8x128xi32>
    %c8_i32 = arith.constant 8 : i32
    %11 = vector.broadcast %c8_i32 : i32 to vector<4x8x128xi32>
    %12 = arith.cmpi slt, %10, %11 : vector<4x8x128xi32>
    %cst_6 = arith.constant 0xFF800000 : f32
    %13 = vector.broadcast %cst_6 : f32 to vector<4x8x128xf32>
    %14 = arith.select %12, %6, %13 : vector<4x8x128xi1>, vector<4x8x128xf32>
    %c0_7 = arith.constant 0 : index
    %c0_8 = arith.constant 0 : index
    %c0_9 = arith.constant 0 : index
    %15 = vector.load %arg8[%c0_7, %c0_8, %c0_9] : memref<4x8x128xf32, #tpu.memory_space<vmem>>, vector<4x8x128xf32>
    %cst_10 = arith.constant dense<0xFF800000> : vector<4x8xf32>
    %16 = vector.multi_reduction <maximumf>, %14, %cst_10 [2] : vector<4x8x128xf32> to vector<4x8xf32>
    %17 = vector.shape_cast %16 : vector<4x8xf32> to vector<4x8x1xf32>
    %18 = vector.broadcast %17 : vector<4x8x1xf32> to vector<4x8x128xf32>
    %19 = arith.maximumf %15, %18 : vector<4x8x128xf32>
    %20 = arith.subf %15, %19 : vector<4x8x128xf32>
    %21 = math.exp2 %20 : vector<4x8x128xf32>
    %22 = arith.subf %14, %19 : vector<4x8x128xf32>
    %23 = math.exp2 %22 : vector<4x8x128xf32>
    %c0_11 = arith.constant 0 : index
    %c0_12 = arith.constant 0 : index
    %c0_13 = arith.constant 0 : index
    %24 = vector.load %arg9[%c0_11, %c0_12, %c0_13] : memref<4x8x128xf32, #tpu.memory_space<vmem>>, vector<4x8x128xf32>
    %25 = arith.mulf %21, %24 : vector<4x8x128xf32>
    %cst_14 = arith.constant dense<0.000000e+00> : vector<4x8xf32>
    %26 = vector.multi_reduction <add>, %23, %cst_14 [2] : vector<4x8x128xf32> to vector<4x8xf32>
    %27 = vector.shape_cast %26 : vector<4x8xf32> to vector<4x8x1xf32>
    %28 = vector.broadcast %27 : vector<4x8x1xf32> to vector<4x8x128xf32>
    %29 = arith.addf %25, %28 : vector<4x8x128xf32>
    %c0_15 = arith.constant 0 : index
    %c0_16 = arith.constant 0 : index
    %c0_17 = arith.constant 0 : index
    %30 = vector.load %arg9[%c0_15, %c0_16, %c0_17] : memref<4x8x128xf32, #tpu.memory_space<vmem>>, vector<4x8x128xf32>
    tpu.vector_store %arg9[%c0_15, %c0_16, %c0_17], %29 {strides = array<i32>} : memref<4x8x128xf32, #tpu.memory_space<vmem>>, vector<4x8x128xf32>,
    %31 = vector.extract_strided_slice %21 {offsets = [0, 0, 0], sizes = [4, 8, 32], strides = [1, 1, 1]} : vector<4x8x128xf32> to vector<4x8x32xf32>
    %c0_18 = arith.constant 0 : index
    %c0_19 = arith.constant 0 : index
    %c0_20 = arith.constant 0 : index
    %32 = vector.load %arg10[%c0_18, %c0_19, %c0_20] : memref<4x8x32xf32, #tpu.memory_space<vmem>>, vector<4x8x32xf32>
    %33 = arith.mulf %31, %32 : vector<4x8x32xf32>
    %34 = arith.truncf %23 : vector<4x8x128xf32> to vector<4x8x128xbf16>
    %c0_21 = arith.constant 0 : index
    %c0_22 = arith.constant 0 : index
    %c0_23 = arith.constant 0 : index
    %35 = vector.load %arg5[%c0_21, %c0_22, %c0_23] : memref<4x128x32xf32, #tpu.memory_space<vmem>>, vector<4x128x32xf32>
    %36 = arith.truncf %35 : vector<4x128x32xf32> to vector<4x128x32xbf16>
    "tpu.trace_start"() <{level = 10 : i32, message = "bqk,bkd->bqd"}> : () -> ()
    %cst_24 = arith.constant dense<0.000000e+00> : vector<4x8x32xf32>
    %37 = tpu.matmul %34, %36, %cst_24 {dimension_numbers = #tpu.dot_dimension_numbers<[2], [1], [1], [2], [0, 0, 0, 1, 1, 2], [0], [0]>} : vector<4x8x128xbf16>, vector<4x128x32xbf16>, vector<4x8x32xf32> -> vector<4x8x32xf32>
    "tpu.trace_stop"() : () -> ()
    %38 = arith.addf %33, %37 : vector<4x8x32xf32>
    %c0_25 = arith.constant 0 : index
    %c0_26 = arith.constant 0 : index
    %c0_27 = arith.constant 0 : index
    %39 = vector.load %arg10[%c0_25, %c0_26, %c0_27] : memref<4x8x32xf32, #tpu.memory_space<vmem>>, vector<4x8x32xf32>
    tpu.vector_store %arg10[%c0_25, %c0_26, %c0_27], %38 {strides = array<i32>} : memref<4x8x32xf32, #tpu.memory_space<vmem>>, vector<4x8x32xf32>,
    %c0_28 = arith.constant 0 : index
    %c0_29 = arith.constant 0 : index
    %c0_30 = arith.constant 0 : index
    %40 = vector.load %arg8[%c0_28, %c0_29, %c0_30] : memref<4x8x128xf32, #tpu.memory_space<vmem>>, vector<4x8x128xf32>
    tpu.vector_store %arg8[%c0_28, %c0_29, %c0_30], %19 {strides = array<i32>} : memref<4x8x128xf32, #tpu.memory_space<vmem>>, vector<4x8x128xf32>,
    %c0_i32_31 = arith.constant 0 : i32
    %41 = arith.cmpi eq, %arg2, %c0_i32_31 : i32
    %42 = arith.extui %41 : i1 to i32
    %c0_i32_32 = arith.constant 0 : i32
    %43 = arith.cmpi ne, %42, %c0_i32_32 : i32
    scf.if %43 {
      %c0_33 = arith.constant 0 : index
      %c0_34 = arith.constant 0 : index
      %c0_35 = arith.constant 0 : index
      %44 = vector.load %arg9[%c0_33, %c0_34, %c0_35] : memref<4x8x128xf32, #tpu.memory_space<vmem>>, vector<4x8x128xf32>
      %45 = tpu.reciprocal %44 {approx = true} : vector<4x8x128xf32> -> vector<4x8x128xf32>
      %c0_36 = arith.constant 0 : index
      %c0_37 = arith.constant 0 : index
      %c0_38 = arith.constant 0 : index
      %46 = vector.load %arg10[%c0_36, %c0_37, %c0_38] : memref<4x8x32xf32, #tpu.memory_space<vmem>>, vector<4x8x32xf32>
      %47 = vector.extract_strided_slice %45 {offsets = [0, 0, 0], sizes = [4, 8, 32], strides = [1, 1, 1]} : vector<4x8x128xf32> to vector<4x8x32xf32>
      %48 = arith.mulf %46, %47 : vector<4x8x32xf32>
      %c0_39 = arith.constant 0 : index
      %c0_40 = arith.constant 0 : index
      %c0_41 = arith.constant 0 : index
      %49 = vector.load %arg6[%c0_39, %c0_40, %c0_41] : memref<4x8x32xf32, #tpu.memory_space<vmem>>, vector<4x8x32xf32>
      tpu.vector_store %arg6[%c0_39, %c0_40, %c0_41], %48 {strides = array<i32>} : memref<4x8x32xf32, #tpu.memory_space<vmem>>, vector<4x8x32xf32>,
    } else {
    }
    return
  }
  func.func @transform_0(%arg0: i32, %arg1: i32, %arg2: i32) -> (i32, i32, i32) {
    %c0_i32 = arith.constant 0 : i32
    %c0_i32_0 = arith.constant 0 : i32
    return %arg0, %arg1, %c0_i32 : i32, i32, i32
  }
  func.func @transform_1(%arg0: i32, %arg1: i32, %arg2: i32) -> (i32, i32, i32) {
    %c0_i32 = arith.constant 0 : i32
    %c0_i32_0 = arith.constant 0 : i32
    return %arg0, %arg2, %c0_i32 : i32, i32, i32
  }
  func.func @transform_2(%arg0: i32, %arg1: i32, %arg2: i32) -> (i32, i32, i32) {
    %c0_i32 = arith.constant 0 : i32
    %c0_i32_0 = arith.constant 0 : i32
    return %arg0, %arg2, %c0_i32 : i32, i32, i32
  }
  func.func @transform_3(%arg0: i32, %arg1: i32, %arg2: i32) -> (i32, i32, i32) {
    %c0_i32 = arith.constant 0 : i32
    %c0_i32_0 = arith.constant 0 : i32
    return %arg0, %arg1, %c0_i32 : i32, i32, i32
  }
}

</mosaic_0001>

<llo_original>
// kernel: tpu_custom_call.1
$region0: #{tpu_custom_call.1}
  #allocation0 [shape = 'u32[]', space=smem, size = 0x4, offset = 0x4, fixed_abs, tag = 'smem constant byte address 0x4 - core index']
  #allocation1 [shape = 'u32[144,128]{1,0:T(1,128)}', space=vmem, size = 0x12000, scoped, tag = 'internal scratch']
  #allocation2 [shape = 'bf16[4,8,32]{2,1,0:T(8,128)(2,1)}', space=vmem, size = 0x2000, scoped, tag = 'scratch operand']
  #allocation3 [shape = 'f32[4,8,128]{2,1,0:T(8,128)}', space=vmem, size = 0x4000, scoped, tag = 'scratch operand']
  #allocation4 [shape = 'f32[4,8,128]{2,1,0:T(8,128)}', space=vmem, size = 0x4000, scoped, tag = 'scratch operand']
  #allocation5 [shape = 'f32[4,8,32]{2,1,0:T(8,128)}', space=vmem, size = 0x4000, scoped, tag = 'scratch operand']
  %s0 = inlined_call_operand.vmem [shape: f32[8,8,32], index: 0, kind: input, shape index: {}]
  %s1 = inlined_call_operand.vmem [shape: f32[8,128,32], index: 1, kind: input, shape index: {}]
  %s2 = inlined_call_operand.vmem [shape: f32[8,128,32], index: 2, kind: input, shape index: {}]
  %s3 = inlined_call_operand.hbm [shape: f32[8,8,32], index: 3, kind: output, shape index: {}]
  %s4 = sld [smem:[#allocation0]]
  $region53: #{tpu_custom_call.1} parent=0
    _
  %s6 = ssub.s32 1, %s4
  %s7 = scalar_select 0, %s6, %s4
  $region1: #{tpu_custom_call.1} parent=0
    #allocation6 [shape = 'u8[32768]{0}', space=vmem, size = 0x8000, scoped, tag = 'output window, operand 0']
    #allocation7 [shape = 's32[2]{0}', space=sflag, size = 0x8, scoped, tag = 'scoped memory for tpu_custom_call.1']
    %8 = vsyncpa [#allocation7], 0
    %s9 = scalar_lea.sflag [#allocation7], 1
    %10 = vsyncpa %s9, 0
    loop: start=0, step=1, limit=4
    $region2: #{tpu_custom_call.1} parent=1 // loop_pre_header
      _
    $region3: #{tpu_custom_call.1} parent=1 // loop_header
      %s12 = sphi 0, %s16
      %p13 = scmp.ge.s32.totalorder %s12, 4
      %s19 = sphi 0, %s38
      %s20 = sphi 0, %s34
      %s21 = sphi 0, %s30
      %s22 = sphi 0, %s19
      %s23 = sphi 0, %s20
      %s24 = sphi 0, %s21
      %s25 = sphi 0, %s22
      %s26 = sphi 0, %s23
      %s27 = sphi 0, %s24
      %s43 = sphi 0, %s45
      %s46 = sphi 0, %s43
      %s47 = sphi 0, %s46
      %s63 = sphi 0, %s47
      %s71 = sphi 0, %s73
      %s74 = sphi 0, %s71
      %s75 = sphi 0, %s74
      %s91 = sphi 0, %s75
      %s99 = sphi 0, %s101
      %s102 = sphi 0, %s99
      %s103 = sphi 0, %s102
      %s119 = sphi 0, %s103
      %s127 = sphi 0, %s129
      %s130 = sphi 0, %s127
      %s131 = sphi 0, %s130
      %s147 = sphi 0, %s131
    $region4: #{tpu_custom_call.1} parent=1 // loop_header_branch
      %15 = sbr.rel (%p13) target = $region8
    $region5: #{tpu_custom_call.1} parent=1 // loop_body
      %s17 = ssub.s32 %s12, 1
      %s18 = ssub.s32 %s12, 2
      %s28 = sadd.s32 1, %s21
      %p29 = scmp.ge.s32.totalorder %s28, 1
      %s30 = scalar_select %p29, 0, %s28
      %s31 = sadd.s32 1, %s20
      %s32 = scalar_select %p29, %s31, %s20
      %p33 = scmp.ge.s32.totalorder %s32, 1
      %s34 = scalar_select %p33, 0, %s32
      %s35 = sadd.s32 1, %s19
      %s36 = scalar_select %p33, %s35, %s19
      %p37 = scmp.ge.s32.totalorder %s36, 2
      %s38 = scalar_select %p37, 0, %s36
      %s39 = ssub.s32 %s19, %s38
      %s40 = ssub.s32 %s20, %s34
      %s41 = sor.u32 %s39, %s40
      %p42 = scmp.eq.s32.totalorder %s41, 0
      %s44 = sadd.s32 %s43, 1
      %s45 = scalar_select %p42, %s43, %s44
      %p48 = pneg %p42
      %p49 = scmp.eq.s32.totalorder %s12, 1
      %p50 = por %p48, %p49
      %p51 = scmp.ne.s32.totalorder %s43, %s46
      %p52 = scmp.eq.s32.totalorder %s12, 0
      %p53 = por %p51, %p52
      %p54 = scmp.ne.s32.totalorder %s43, %s46
      %p55 = scmp.eq.s32.totalorder %s17, 1
      %p56 = por %p54, %p55
      %p57 = scmp.ne.s32.totalorder %s46, %s47
      %p58 = scmp.eq.s32.totalorder %s17, 0
      %p59 = por %p57, %p58
      %p60 = scmp.ne.s32.totalorder %s46, %s47
      %p61 = scmp.eq.s32.totalorder %s18, 1
      %p62 = por %p60, %p61
      %p64 = scmp.ne.s32.totalorder %s47, %s63
      %p65 = scmp.eq.s32.totalorder %s18, 0
      %p66 = por %p64, %p65
      %s67 = ssub.s32 %s19, %s38
      %s68 = ssub.s32 %s21, %s30
      %s69 = sor.u32 %s67, %s68
      %p70 = scmp.eq.s32.totalorder %s69, 0
      %s72 = sadd.s32 %s71, 1
      %s73 = scalar_select %p70, %s71, %s72
      %p76 = pneg %p70
      %p77 = scmp.eq.s32.totalorder %s12, 1
      %p78 = por %p76, %p77
      %p79 = scmp.ne.s32.totalorder %s71, %s74
      %p80 = scmp.eq.s32.totalorder %s12, 0
      %p81 = por %p79, %p80
      %p82 = scmp.ne.s32.totalorder %s71, %s74
      %p83 = scmp.eq.s32.totalorder %s17, 1
      %p84 = por %p82, %p83
      %p85 = scmp.ne.s32.totalorder %s74, %s75
      %p86 = scmp.eq.s32.totalorder %s17, 0
      %p87 = por %p85, %p86
      %p88 = scmp.ne.s32.totalorder %s74, %s75
      %p89 = scmp.eq.s32.totalorder %s18, 1
      %p90 = por %p88, %p89
      %p92 = scmp.ne.s32.totalorder %s75, %s91
      %p93 = scmp.eq.s32.totalorder %s18, 0
      %p94 = por %p92, %p93
      %s95 = ssub.s32 %s19, %s38
      %s96 = ssub.s32 %s21, %s30
      %s97 = sor.u32 %s95, %s96
      %p98 = scmp.eq.s32.totalorder %s97, 0
      %s100 = sadd.s32 %s99, 1
      %s101 = scalar_select %p98, %s99, %s100
      %p104 = pneg %p98
      %p105 = scmp.eq.s32.totalorder %s12, 1
      %p106 = por %p104, %p105
      %p107 = scmp.ne.s32.totalorder %s99, %s102
      %p108 = scmp.eq.s32.totalorder %s12, 0
      %p109 = por %p107, %p108
      %p110 = scmp.ne.s32.totalorder %s99, %s102
      %p111 = scmp.eq.s32.totalorder %s17, 1
      %p112 = por %p110, %p111
      %p113 = scmp.ne.s32.totalorder %s102, %s103
      %p114 = scmp.eq.s32.totalorder %s17, 0
      %p115 = por %p113, %p114
      %p116 = scmp.ne.s32.totalorder %s102, %s103
      %p117 = scmp.eq.s32.totalorder %s18, 1
      %p118 = por %p116, %p117
      %p120 = scmp.ne.s32.totalorder %s103, %s119
      %p121 = scmp.eq.s32.totalorder %s18, 0
      %p122 = por %p120, %p121
      %s123 = ssub.s32 %s19, %s38
      %s124 = ssub.s32 %s20, %s34
      %s125 = sor.u32 %s123, %s124
      %p126 = scmp.eq.s32.totalorder %s125, 0
      %s128 = sadd.s32 %s127, 1
      %s129 = scalar_select %p126, %s127, %s128
      %p132 = pneg %p126
      %p133 = scmp.eq.s32.totalorder %s12, 1
      %p134 = por %p132, %p133
      %p135 = scmp.ne.s32.totalorder %s127, %s130
      %p136 = scmp.eq.s32.totalorder %s12, 0
      %p137 = por %p135, %p136
      %p138 = scmp.ne.s32.totalorder %s127, %s130
      %p139 = scmp.eq.s32.totalorder %s17, 1
      %p140 = por %p138, %p139
      %p141 = scmp.ne.s32.totalorder %s130, %s131
      %p142 = scmp.eq.s32.totalorder %s17, 0
      %p143 = por %p141, %p142
      %p144 = scmp.ne.s32.totalorder %s130, %s131
      %p145 = scmp.eq.s32.totalorder %s18, 1
      %p146 = por %p144, %p145
      %p148 = scmp.ne.s32.totalorder %s131, %s147
      %p149 = scmp.eq.s32.totalorder %s18, 0
      %p150 = por %p148, %p149
      %p151 = scmp.le.s32.totalorder 1, %s12
      %p152 = scmp.lt.s32.totalorder %s12, 3
      %p153 = pnand %p151, %p152
      %p154 = pneg %p153
      // Predicated region
      $region9: #{tpu_custom_call.1} parent=5 // pred_check
        _
      $region10: #{tpu_custom_call.1} parent=5 // pred_check_branch
        %156 = sbr.rel (%p153) target = $region12
      $region11: #{tpu_custom_call.1} parent=5 // pred_region
        %s157 = ssub.s32 %s12, 1
      $region12: #{tpu_custom_call.1} parent=5 // pred_fallthru
        _
      %p158 = scmp.lt.s32.totalorder %s12, 2
      // Predicated region
      $region13: #{tpu_custom_call.1} parent=5 // pred_check
        %p159 = pneg %p158
      $region14: #{tpu_custom_call.1} parent=5 // pred_check_branch
        %161 = sbr.rel (%p159) target = $region16
      $region15: #{tpu_custom_call.1} parent=5 // pred_region
        // Predicated region
        $region17: #{tpu_custom_call.1} parent=15 // pred_check
          %p162 = pneg %p53
        $region18: #{tpu_custom_call.1} parent=15 // pred_check_branch
          %164 = sbr.rel (%p162) target = $region20
        $region19: #{tpu_custom_call.1} parent=15 // pred_region
          %s165 = smul.u32 4, %s19
          %p166 = scmp.lt.s32.totalorder %s165, 7
          %s167 = scalar_select %p166, %s165, 7
          %p168 = scmp.lt.s32.totalorder %s20, 0
          %s169 = scalar_select %p168, %s20, 0
          %s170 = sadd.s32 %s169, %s167
          %s171 = smul.addr %s170, 8
          %s172 = scalar_lea.vmem %s0, %s171
          %s173 = smul.u32 4, %s19
        $region20: #{tpu_custom_call.1} parent=15 // pred_fallthru
          _
        // Predicated region
        $region21: #{tpu_custom_call.1} parent=15 // pred_check
          %p174 = pneg %p81
        $region22: #{tpu_custom_call.1} parent=15 // pred_check_branch
          %176 = sbr.rel (%p174) target = $region24
        $region23: #{tpu_custom_call.1} parent=15 // pred_region
          %s177 = smul.u32 4, %s19
          %s178 = smul.u32 16, %s21
          %p179 = scmp.lt.s32.totalorder %s177, 7
          %s180 = scalar_select %p179, %s177, 7
          %p181 = scmp.lt.s32.totalorder %s178, 15
          %s182 = scalar_select %p181, %s178, 15
          %s183 = smul.addr %s180, 16
          %s184 = sadd.s32 %s182, %s183
          %s185 = smul.addr %s184, 8
          %s186 = scalar_lea.vmem %s1, %s185
          %s187 = smul.u32 4, %s19
          %s188 = smul.u32 16, %s21
        $region24: #{tpu_custom_call.1} parent=15 // pred_fallthru
          _
        // Predicated region
        $region25: #{tpu_custom_call.1} parent=15 // pred_check
          %p189 = pneg %p109
        $region26: #{tpu_custom_call.1} parent=15 // pred_check_branch
          %191 = sbr.rel (%p189) target = $region28
        $region27: #{tpu_custom_call.1} parent=15 // pred_region
          %s192 = smul.u32 4, %s19
          %s193 = smul.u32 16, %s21
          %p194 = scmp.lt.s32.totalorder %s192, 7
          %s195 = scalar_select %p194, %s192, 7
          %p196 = scmp.lt.s32.totalorder %s193, 15
          %s197 = scalar_select %p196, %s193, 15
          %s198 = smul.addr %s195, 16
          %s199 = sadd.s32 %s197, %s198
          %s200 = smul.addr %s199, 8
          %s201 = scalar_lea.vmem %s2, %s200
          %s202 = smul.u32 4, %s19
          %s203 = smul.u32 16, %s21
        $region28: #{tpu_custom_call.1} parent=15 // pred_fallthru
          _
      $region16: #{tpu_custom_call.1} parent=5 // pred_fallthru
        _
      %p204 = scmp.le.s32.totalorder 1, %s12
      %p205 = scmp.lt.s32.totalorder %s12, 3
      %p206 = pnand %p204, %p205
      %p207 = pneg %p206
      // Predicated region
      $region29: #{tpu_custom_call.1} parent=5 // pred_check
        _
      $region30: #{tpu_custom_call.1} parent=5 // pred_check_branch
        %209 = sbr.rel (%p206) target = $region32
      $region31: #{tpu_custom_call.1} parent=5 // pred_region
        %s210 = ssub.s32 %s12, 1
        %s211 = smul.u32 4, %s22
        %p212 = scmp.lt.s32.totalorder %s211, 7
        %s213 = scalar_select %p212, %s211, 7
        %p214 = scmp.lt.s32.totalorder %s23, 0
        %s215 = scalar_select %p214, %s23, 0
        %s216 = sadd.s32 %s215, %s213
        %s217 = smul.addr %s216, 8
        %s218 = scalar_lea.vmem %s0, %s217
        %p219 = pneg %p59
        %p220 = pneg %p56
        %s221 = smul.u32 4, %s22
        %s222 = smul.u32 16, %s24
        %p223 = scmp.lt.s32.totalorder %s221, 7
        %s224 = scalar_select %p223, %s221, 7
        %p225 = scmp.lt.s32.totalorder %s222, 15
        %s226 = scalar_select %p225, %s222, 15
        %s227 = smul.addr %s224, 16
        %s228 = sadd.s32 %s226, %s227
        %s229 = smul.addr %s228, 8
        %s230 = scalar_lea.vmem %s1, %s229
        %p231 = pneg %p87
        %p232 = pneg %p84
        %s233 = smul.u32 4, %s22
        %s234 = smul.u32 16, %s24
        %p235 = scmp.lt.s32.totalorder %s233, 7
        %s236 = scalar_select %p235, %s233, 7
        %p237 = scmp.lt.s32.totalorder %s234, 15
        %s238 = scalar_select %p237, %s234, 15
        %s239 = smul.addr %s236, 16
        %s240 = sadd.s32 %s238, %s239
        %s241 = smul.addr %s240, 8
        %s242 = scalar_lea.vmem %s2, %s241
        %p243 = pneg %p115
        %p244 = pneg %p112
        %p245 = pneg %p143
        %p246 = pneg %p140
        %s247 = sand.u32 %s130, 1
        %s248 = scalar_lea.sflag [#allocation7], %s247
        %s249 = sand.u32 %s130, 1
        %s250 = smul.addr %s249, 32
        %s251 = scalar_lea.vmem [#allocation6], %s250
        %s252 = smul.u32 4, %s22
        %p253 = scmp.lt.s32.totalorder %s252, 7
        %s254 = scalar_select %p253, %s252, 7
        %p255 = scmp.lt.s32.totalorder %s23, 0
        %s256 = scalar_select %p255, %s23, 0
        %s257 = sadd.s32 %s256, %s254
        %s258 = smul.addr %s257, 8
        %s259 = scalar_lea.vmem %s0, %s258
        %s260 = smul.u32 4, %s22
        %s261 = smul.u32 4, %s22
        %s262 = smul.u32 16, %s24
        %p263 = scmp.lt.s32.totalorder %s261, 7
        %s264 = scalar_select %p263, %s261, 7
        %p265 = scmp.lt.s32.totalorder %s262, 15
        %s266 = scalar_select %p265, %s262, 15
        %s267 = smul.addr %s264, 16
        %s268 = sadd.s32 %s266, %s267
        %s269 = smul.addr %s268, 8
        %s270 = scalar_lea.vmem %s1, %s269
        %s271 = smul.u32 4, %s22
        %s272 = smul.u32 16, %s24
        %s273 = smul.u32 4, %s22
        %s274 = smul.u32 16, %s24
        %p275 = scmp.lt.s32.totalorder %s273, 7
        %s276 = scalar_select %p275, %s273, 7
        %p277 = scmp.lt.s32.totalorder %s274, 15
        %s278 = scalar_select %p277, %s274, 15
        %s279 = smul.addr %s276, 16
        %s280 = sadd.s32 %s278, %s279
        %s281 = smul.addr %s280, 8
        %s282 = scalar_lea.vmem %s2, %s281
        %s283 = smul.u32 4, %s22
        %s284 = smul.u32 16, %s24
        %s285 = smul.u32 4, %s22
        %p287 = scmp.eq.s32.totalorder %s24, 0
        // Predicated region
        $region33: #{tpu_custom_call.1} parent=31 // pred_check
          %p288 = pneg %p287
        $region34: #{tpu_custom_call.1} parent=31 // pred_check_branch
          %290 = sbr.rel (%p288) target = $region36
        $region35: #{tpu_custom_call.1} parent=31 // pred_region
          %v291 = vld [vmem:[%s259] sm:$0xff]
          %v292 = vld [vmem:[%s259 + $0x8] sm:$0xff]
          %v293 = vld [vmem:[%s259 + $0x10] sm:$0xff]
          %v294 = vld [vmem:[%s259 + $0x18] sm:$0xff]
          %v295 = vmul.f32 %v291, 0.25503486
          %v296 = vmul.f32 %v292, 0.25503486
          %v297 = vmul.f32 %v293, 0.25503486
          %v298 = vmul.f32 %v294, 0.25503486
          %v299 = vpack.c.bf16 %v295, %v295
          %v300 = vpack.c.bf16 %v296, %v296
          %v301 = vpack.c.bf16 %v297, %v297
          %v302 = vpack.c.bf16 %v298, %v298
          %vm303 = vcmask 257024
          %304 = vst.msk [vmem:[#allocation2] sm:$0xf] %vm303, %v299
          %305 = vst.msk [vmem:[#allocation2 + $0x4] sm:$0xf] %vm303, %v300
          %306 = vst.msk [vmem:[#allocation2 + $0x8] sm:$0xf] %vm303, %v301
          %307 = vst.msk [vmem:[#allocation2 + $0xc] sm:$0xf] %vm303, %v302
          %308 = vst [vmem:[#allocation3] sm:$0xff] -inf
          %309 = vst [vmem:[#allocation3 + $0x8] sm:$0xff] -inf
          %310 = vst [vmem:[#allocation3 + $0x10] sm:$0xff] -inf
          %311 = vst [vmem:[#allocation3 + $0x18] sm:$0xff] -inf
          %312 = vst [vmem:[#allocation4] sm:$0xff] 0.0
          %313 = vst [vmem:[#allocation4 + $0x8] sm:$0xff] 0.0
          %314 = vst [vmem:[#allocation4 + $0x10] sm:$0xff] 0.0
          %315 = vst [vmem:[#allocation4 + $0x18] sm:$0xff] 0.0
          %vm316 = vcmask 261120
          %317 = vst.msk [vmem:[#allocation5] sm:$0xff] %vm316, 0.0
          %318 = vst.msk [vmem:[#allocation5 + $0x8] sm:$0xff] %vm316, 0.0
          %319 = vst.msk [vmem:[#allocation5 + $0x10] sm:$0xff] %vm316, 0.0
          %320 = vst.msk [vmem:[#allocation5 + $0x18] sm:$0xff] %vm316, 0.0
        $region36: #{tpu_custom_call.1} parent=31 // pred_fallthru
          _
        %v321 = vld [vmem:[#allocation2] sm:$0xf]
        %v322 = vld [vmem:[#allocation2 + $0x4] sm:$0xf]
        %v323 = vld [vmem:[#allocation2 + $0x8] sm:$0xf]
        %v324 = vld [vmem:[#allocation2 + $0xc] sm:$0xf]
        %v325 = vld [vmem:[%s270] sm:$0xff]
        %v326 = vld [vmem:[%s270 + $0x8] sm:$0xff]
        %v327 = vld [vmem:[%s270 + $0x10] sm:$0xff]
        %v328 = vld [vmem:[%s270 + $0x18] sm:$0xff]
        %v329 = vld [vmem:[%s270 + $0x20] sm:$0xff]
        %v330 = vld [vmem:[%s270 + $0x28] sm:$0xff]
        %v331 = vld [vmem:[%s270 + $0x30] sm:$0xff]
        %v332 = vld [vmem:[%s270 + $0x38] sm:$0xff]
        %v333 = vld [vmem:[%s270 + $0x40] sm:$0xff]
        %v334 = vld [vmem:[%s270 + $0x48] sm:$0xff]
        %v335 = vld [vmem:[%s270 + $0x50] sm:$0xff]
        %v336 = vld [vmem:[%s270 + $0x58] sm:$0xff]
        %v337 = vld [vmem:[%s270 + $0x60] sm:$0xff]
        %v338 = vld [vmem:[%s270 + $0x68] sm:$0xff]
        %v339 = vld [vmem:[%s270 + $0x70] sm:$0xff]
        %v340 = vld [vmem:[%s270 + $0x78] sm:$0xff]
        %v341 = vld [vmem:[%s270 + $0x80] sm:$0xff]
        %v342 = vld [vmem:[%s270 + $0x88] sm:$0xff]
        %v343 = vld [vmem:[%s270 + $0x90] sm:$0xff]
        %v344 = vld [vmem:[%s270 + $0x98] sm:$0xff]
        %v345 = vld [vmem:[%s270 + $0xa0] sm:$0xff]
        %v346 = vld [vmem:[%s270 + $0xa8] sm:$0xff]
        %v347 = vld [vmem:[%s270 + $0xb0] sm:$0xff]
        %v348 = vld [vmem:[%s270 + $0xb8] sm:$0xff]
        %v349 = vld [vmem:[%s270 + $0xc0] sm:$0xff]
        %v350 = vld [vmem:[%s270 + $0xc8] sm:$0xff]
        %v351 = vld [vmem:[%s270 + $0xd0] sm:$0xff]
        %v352 = vld [vmem:[%s270 + $0xd8] sm:$0xff]
        %v353 = vld [vmem:[%s270 + $0xe0] sm:$0xff]
        %v354 = vld [vmem:[%s270 + $0xe8] sm:$0xff]
        %v355 = vld [vmem:[%s270 + $0xf0] sm:$0xff]
        %v356 = vld [vmem:[%s270 + $0xf8] sm:$0xff]
        %v357 = vld [vmem:[%s270 + $0x100] sm:$0xff]
        %v358 = vld [vmem:[%s270 + $0x108] sm:$0xff]
        %v359 = vld [vmem:[%s270 + $0x110] sm:$0xff]
        %v360 = vld [vmem:[%s270 + $0x118] sm:$0xff]
        %v361 = vld [vmem:[%s270 + $0x120] sm:$0xff]
        %v362 = vld [vmem:[%s270 + $0x128] sm:$0xff]
        %v363 = vld [vmem:[%s270 + $0x130] sm:$0xff]
        %v364 = vld [vmem:[%s270 + $0x138] sm:$0xff]
        %v365 = vld [vmem:[%s270 + $0x140] sm:$0xff]
        %v366 = vld [vmem:[%s270 + $0x148] sm:$0xff]
        %v367 = vld [vmem:[%s270 + $0x150] sm:$0xff]
        %v368 = vld [vmem:[%s270 + $0x158] sm:$0xff]
        %v369 = vld [vmem:[%s270 + $0x160] sm:$0xff]
        %v370 = vld [vmem:[%s270 + $0x168] sm:$0xff]
        %v371 = vld [vmem:[%s270 + $0x170] sm:$0xff]
        %v372 = vld [vmem:[%s270 + $0x178] sm:$0xff]
        %v373 = vld [vmem:[%s270 + $0x180] sm:$0xff]
        %v374 = vld [vmem:[%s270 + $0x188] sm:$0xff]
        %v375 = vld [vmem:[%s270 + $0x190] sm:$0xff]
        %v376 = vld [vmem:[%s270 + $0x198] sm:$0xff]
        %v377 = vld [vmem:[%s270 + $0x1a0] sm:$0xff]
        %v378 = vld [vmem:[%s270 + $0x1a8] sm:$0xff]
        %v379 = vld [vmem:[%s270 + $0x1b0] sm:$0xff]
        %v380 = vld [vmem:[%s270 + $0x1b8] sm:$0xff]
        %v381 = vld [vmem:[%s270 + $0x1c0] sm:$0xff]
        %v382 = vld [vmem:[%s270 + $0x1c8] sm:$0xff]
        %v383 = vld [vmem:[%s270 + $0x1d0] sm:$0xff]
        %v384 = vld [vmem:[%s270 + $0x1d8] sm:$0xff]
        %v385 = vld [vmem:[%s270 + $0x1e0] sm:$0xff]
        %v386 = vld [vmem:[%s270 + $0x1e8] sm:$0xff]
        %v387 = vld [vmem:[%s270 + $0x1f0] sm:$0xff]
        %v388 = vld [vmem:[%s270 + $0x1f8] sm:$0xff]
        %v389 = vpack.c.bf16 %v326, %v325
        %v390 = vpack.c.bf16 %v328, %v327
        %v391 = vpack.c.bf16 %v330, %v329
        %v392 = vpack.c.bf16 %v332, %v331
        %v393 = vpack.c.bf16 %v334, %v333
        %v394 = vpack.c.bf16 %v336, %v335
        %v395 = vpack.c.bf16 %v338, %v337
        %v396 = vpack.c.bf16 %v340, %v339
        %v397 = vpack.c.bf16 %v342, %v341
        %v398 = vpack.c.bf16 %v344, %v343
        %v399 = vpack.c.bf16 %v346, %v345
        %v400 = vpack.c.bf16 %v348, %v347
        %v401 = vpack.c.bf16 %v350, %v349
        %v402 = vpack.c.bf16 %v352, %v351
        %v403 = vpack.c.bf16 %v354, %v353
        %v404 = vpack.c.bf16 %v356, %v355
        %v405 = vpack.c.bf16 %v358, %v357
        %v406 = vpack.c.bf16 %v360, %v359
        %v407 = vpack.c.bf16 %v362, %v361
        %v408 = vpack.c.bf16 %v364, %v363
        %v409 = vpack.c.bf16 %v366, %v365
        %v410 = vpack.c.bf16 %v368, %v367
        %v411 = vpack.c.bf16 %v370, %v369
        %v412 = vpack.c.bf16 %v372, %v371
        %v413 = vpack.c.bf16 %v374, %v373
        %v414 = vpack.c.bf16 %v376, %v375
        %v415 = vpack.c.bf16 %v378, %v377
        %v416 = vpack.c.bf16 %v380, %v379
        %v417 = vpack.c.bf16 %v382, %v381
        %v418 = vpack.c.bf16 %v384, %v383
        %v419 = vpack.c.bf16 %v386, %v385
        %v420 = vpack.c.bf16 %v388, %v387
        %vm421 = vcmask 261120
        %v423 = vsel %vm421, %v321, 0
        %v426 = vsel %vm421, %v389, 0
        %v429 = vsel %vm421, %v390, 0
        %v432 = vsel %vm421, %v391, 0
        %v435 = vsel %vm421, %v392, 0
        %v438 = vsel %vm421, %v393, 0
        %v441 = vsel %vm421, %v394, 0
        %v444 = vsel %vm421, %v395, 0
        %v447 = vsel %vm421, %v396, 0
        %449 = vmatprep.subr.bf16.mxu0 0
        %450 = vmatpush1.bf16.xpose.msra.mxu0 %v426
        %451 = vmatprep.subr.bf16.mxu0 0
        %452 = vmatpush1.bf16.xpose.msra.mxu0 %v429
        %453 = vmatprep.subr.bf16.mxu0 0
        %454 = vmatpush1.bf16.xpose.msra.mxu0 %v432
        %455 = vmatprep.subr.bf16.mxu0 0
        %456 = vmatpush1.bf16.xpose.msra.mxu0 %v435
        %457 = vmatprep.subr.bf16.mxu0 0
        %458 = vmatpush1.bf16.xpose.msra.mxu0 %v438
        %459 = vmatprep.subr.bf16.mxu0 0
        %460 = vmatpush1.bf16.xpose.msra.mxu0 %v441
        %461 = vmatprep.subr.bf16.mxu0 0
        %462 = vmatpush1.bf16.xpose.msra.mxu0 %v444
        %463 = vmatprep.subr.bf16.mxu0 0
        %464 = vmatpush1.bf16.xpose.msra.mxu0 %v447
        %465 = vmatprep.subr.bf16.mxu0 0
        %466 = vmatpush1.bf16.xpose.msra.mxu0 0
        %467 = vmatprep.subr.bf16.mxu0 0
        %468 = vmatpush1.bf16.xpose.msra.mxu0 0
        %469 = vmatprep.subr.bf16.mxu0 0
        %470 = vmatpush1.bf16.xpose.msra.mxu0 0
        %471 = vmatprep.subr.bf16.mxu0 0
        %472 = vmatpush1.bf16.xpose.msra.mxu0 0
        %473 = vmatprep.subr.bf16.mxu0 0
        %474 = vmatpush1.bf16.xpose.msra.mxu0 0
        %475 = vmatprep.subr.bf16.mxu0 0
        %476 = vmatpush1.bf16.xpose.msra.mxu0 0
        %477 = vmatprep.subr.bf16.mxu0 0
        %478 = vmatpush1.bf16.xpose.msra.mxu0 0
        %479 = vmatprep.subr.bf16.mxu0 0
        %480 = vmatpush1.bf16.xpose.msra.mxu0 0
        %481 = vmatprep.mubr.bf16.mxu0 0
        %482 = vmatmul.mubr.bf16.gmra.mrb[0].mxu0 %v423
        %v483 = vpop.f32.mrb[0].mxu0
        %v484 = vadd.f32 0.0, %v483
        %v485 = vpop.f32.mrb[0].mxu0
        %v486 = vpop.f32.mrb[0].mxu0
        %v487 = vpop.f32.mrb[0].mxu0
        %488 = vdwg.mxu0
        %v490 = vsel %vm421, %v322, 0
        %v493 = vsel %vm421, %v397, 0
        %v496 = vsel %vm421, %v398, 0
        %v499 = vsel %vm421, %v399, 0
        %v502 = vsel %vm421, %v400, 0
        %v505 = vsel %vm421, %v401, 0
        %v508 = vsel %vm421, %v402, 0
        %v511 = vsel %vm421, %v403, 0
        %v514 = vsel %vm421, %v404, 0
        %516 = vmatprep.subr.bf16.mxu0 0
        %517 = vmatpush1.bf16.xpose.msra.mxu0 %v493
        %518 = vmatprep.subr.bf16.mxu0 0
        %519 = vmatpush1.bf16.xpose.msra.mxu0 %v496
        %520 = vmatprep.subr.bf16.mxu0 0
        %521 = vmatpush1.bf16.xpose.msra.mxu0 %v499
        %522 = vmatprep.subr.bf16.mxu0 0
        %523 = vmatpush1.bf16.xpose.msra.mxu0 %v502
        %524 = vmatprep.subr.bf16.mxu0 0
        %525 = vmatpush1.bf16.xpose.msra.mxu0 %v505
        %526 = vmatprep.subr.bf16.mxu0 0
        %527 = vmatpush1.bf16.xpose.msra.mxu0 %v508
        %528 = vmatprep.subr.bf16.mxu0 0
        %529 = vmatpush1.bf16.xpose.msra.mxu0 %v511
        %530 = vmatprep.subr.bf16.mxu0 0
        %531 = vmatpush1.bf16.xpose.msra.mxu0 %v514
        %532 = vmatprep.subr.bf16.mxu0 0
        %533 = vmatpush1.bf16.xpose.msra.mxu0 0
        %534 = vmatprep.subr.bf16.mxu0 0
        %535 = vmatpush1.bf16.xpose.msra.mxu0 0
        %536 = vmatprep.subr.bf16.mxu0 0
        %537 = vmatpush1.bf16.xpose.msra.mxu0 0
        %538 = vmatprep.subr.bf16.mxu0 0
        %539 = vmatpush1.bf16.xpose.msra.mxu0 0
        %540 = vmatprep.subr.bf16.mxu0 0
        %541 = vmatpush1.bf16.xpose.msra.mxu0 0
        %542 = vmatprep.subr.bf16.mxu0 0
        %543 = vmatpush1.bf16.xpose.msra.mxu0 0
        %544 = vmatprep.subr.bf16.mxu0 0
        %545 = vmatpush1.bf16.xpose.msra.mxu0 0
        %546 = vmatprep.subr.bf16.mxu0 0
        %547 = vmatpush1.bf16.xpose.msra.mxu0 0
        %548 = vmatprep.mubr.bf16.mxu0 0
        %549 = vmatmul.mubr.bf16.gmra.mrb[0].mxu0 %v490
        %v550 = vpop.f32.mrb[0].mxu0
        %v551 = vadd.f32 0.0, %v550
        %v552 = vpop.f32.mrb[0].mxu0
        %v553 = vpop.f32.mrb[0].mxu0
        %v554 = vpop.f32.mrb[0].mxu0
        %555 = vdwg.mxu0
        %v557 = vsel %vm421, %v323, 0
        %v560 = vsel %vm421, %v405, 0
        %v563 = vsel %vm421, %v406, 0
        %v566 = vsel %vm421, %v407, 0
        %v569 = vsel %vm421, %v408, 0
        %v572 = vsel %vm421, %v409, 0
        %v575 = vsel %vm421, %v410, 0
        %v578 = vsel %vm421, %v411, 0
        %v581 = vsel %vm421, %v412, 0
        %583 = vmatprep.subr.bf16.mxu0 0
        %584 = vmatpush1.bf16.xpose.msra.mxu0 %v560
        %585 = vmatprep.subr.bf16.mxu0 0
        %586 = vmatpush1.bf16.xpose.msra.mxu0 %v563
        %587 = vmatprep.subr.bf16.mxu0 0
        %588 = vmatpush1.bf16.xpose.msra.mxu0 %v566
        %589 = vmatprep.subr.bf16.mxu0 0
        %590 = vmatpush1.bf16.xpose.msra.mxu0 %v569
        %591 = vmatprep.subr.bf16.mxu0 0
        %592 = vmatpush1.bf16.xpose.msra.mxu0 %v572
        %593 = vmatprep.subr.bf16.mxu0 0
        %594 = vmatpush1.bf16.xpose.msra.mxu0 %v575
        %595 = vmatprep.subr.bf16.mxu0 0
        %596 = vmatpush1.bf16.xpose.msra.mxu0 %v578
        %597 = vmatprep.subr.bf16.mxu0 0
        %598 = vmatpush1.bf16.xpose.msra.mxu0 %v581
        %599 = vmatprep.subr.bf16.mxu0 0
        %600 = vmatpush1.bf16.xpose.msra.mxu0 0
        %601 = vmatprep.subr.bf16.mxu0 0
        %602 = vmatpush1.bf16.xpose.msra.mxu0 0
        %603 = vmatprep.subr.bf16.mxu0 0
        %604 = vmatpush1.bf16.xpose.msra.mxu0 0
        %605 = vmatprep.subr.bf16.mxu0 0
        %606 = vmatpush1.bf16.xpose.msra.mxu0 0
        %607 = vmatprep.subr.bf16.mxu0 0
        %608 = vmatpush1.bf16.xpose.msra.mxu0 0
        %609 = vmatprep.subr.bf16.mxu0 0
        %610 = vmatpush1.bf16.xpose.msra.mxu0 0
        %611 = vmatprep.subr.bf16.mxu0 0
        %612 = vmatpush1.bf16.xpose.msra.mxu0 0
        %613 = vmatprep.subr.bf16.mxu0 0
        %614 = vmatpush1.bf16.xpose.msra.mxu0 0
        %615 = vmatprep.mubr.bf16.mxu0 0
        %616 = vmatmul.mubr.bf16.gmra.mrb[0].mxu0 %v557
        %v617 = vpop.f32.mrb[0].mxu0
        %v618 = vadd.f32 0.0, %v617
        %v619 = vpop.f32.mrb[0].mxu0
        %v620 = vpop.f32.mrb[0].mxu0
        %v621 = vpop.f32.mrb[0].mxu0
        %622 = vdwg.mxu0
        %v624 = vsel %vm421, %v324, 0
        %v627 = vsel %vm421, %v413, 0
        %v630 = vsel %vm421, %v414, 0
        %v633 = vsel %vm421, %v415, 0
        %v636 = vsel %vm421, %v416, 0
        %v639 = vsel %vm421, %v417, 0
        %v642 = vsel %vm421, %v418, 0
        %v645 = vsel %vm421, %v419, 0
        %v648 = vsel %vm421, %v420, 0
        %650 = vmatprep.subr.bf16.mxu0 0
        %651 = vmatpush1.bf16.xpose.msra.mxu0 %v627
        %652 = vmatprep.subr.bf16.mxu0 0
        %653 = vmatpush1.bf16.xpose.msra.mxu0 %v630
        %654 = vmatprep.subr.bf16.mxu0 0
        %655 = vmatpush1.bf16.xpose.msra.mxu0 %v633
        %656 = vmatprep.subr.bf16.mxu0 0
        %657 = vmatpush1.bf16.xpose.msra.mxu0 %v636
        %658 = vmatprep.subr.bf16.mxu0 0
        %659 = vmatpush1.bf16.xpose.msra.mxu0 %v639
        %660 = vmatprep.subr.bf16.mxu0 0
        %661 = vmatpush1.bf16.xpose.msra.mxu0 %v642
        %662 = vmatprep.subr.bf16.mxu0 0
        %663 = vmatpush1.bf16.xpose.msra.mxu0 %v645
        %664 = vmatprep.subr.bf16.mxu0 0
        %665 = vmatpush1.bf16.xpose.msra.mxu0 %v648
        %666 = vmatprep.subr.bf16.mxu0 0
        %667 = vmatpush1.bf16.xpose.msra.mxu0 0
        %668 = vmatprep.subr.bf16.mxu0 0
        %669 = vmatpush1.bf16.xpose.msra.mxu0 0
        %670 = vmatprep.subr.bf16.mxu0 0
        %671 = vmatpush1.bf16.xpose.msra.mxu0 0
        %672 = vmatprep.subr.bf16.mxu0 0
        %673 = vmatpush1.bf16.xpose.msra.mxu0 0
        %674 = vmatprep.subr.bf16.mxu0 0
        %675 = vmatpush1.bf16.xpose.msra.mxu0 0
        %676 = vmatprep.subr.bf16.mxu0 0
        %677 = vmatpush1.bf16.xpose.msra.mxu0 0
        %678 = vmatprep.subr.bf16.mxu0 0
        %679 = vmatpush1.bf16.xpose.msra.mxu0 0
        %680 = vmatprep.subr.bf16.mxu0 0
        %681 = vmatpush1.bf16.xpose.msra.mxu0 0
        %682 = vmatprep.mubr.bf16.mxu0 0
        %683 = vmatmul.mubr.bf16.gmra.mrb[0].mxu0 %v624
        %v684 = vpop.f32.mrb[0].mxu0
        %v685 = vadd.f32 0.0, %v684
        %v686 = vpop.f32.mrb[0].mxu0
        %v687 = vpop.f32.mrb[0].mxu0
        %v688 = vpop.f32.mrb[0].mxu0
        %689 = vdwg.mxu0
        %s690 = smul.u32 %s24, 128
        %v691 = vlaneseq
        %v692 = vand.u32 %v691, 127
        %v693 = vstv %s690
        %v694 = vadd.s32 %v693, %v692
        %vm695 = vcmp.lt.s32.totalorder %v694, 8
        %v696 = vsel %vm695, %v484, -inf
        %v697 = vsel %vm695, %v551, -inf
        %v698 = vsel %vm695, %v618, -inf
        %v699 = vsel %vm695, %v685, -inf
        %v700 = vld [vmem:[#allocation3] sm:$0xff]
        %v701 = vld [vmem:[#allocation3 + $0x8] sm:$0xff]
        %v702 = vld [vmem:[#allocation3 + $0x10] sm:$0xff]
        %v703 = vld [vmem:[#allocation3 + $0x18] sm:$0xff]
        %704 = vmax.xlane.f32.xlu0 %v696
        %v705 = vpop.xlane.xlu0 %704
        %706 = vmax.xlane.f32.xlu0 %v697
        %v707 = vpop.xlane.xlu0 %706
        %708 = vmax.xlane.f32.xlu0 %v698
        %v709 = vpop.xlane.xlu0 %708
        %710 = vmax.xlane.f32.xlu0 %v699
        %v711 = vpop.xlane.xlu0 %710
        %v712 = vmax.f32 %v700, %v705
        %v713 = vmax.f32 %v701, %v707
        %v714 = vmax.f32 %v702, %v709
        %v715 = vmax.f32 %v703, %v711
        %v716 = vsub.f32 %v700, %v712
        %v717 = vsub.f32 %v701, %v713
        %v718 = vsub.f32 %v702, %v714
        %v719 = vsub.f32 %v703, %v715
        %v720 = vpow.pop %v716
        %v721 = vpow.pop %v717
        %v722 = vpow.pop %v718
        %v723 = vpow.pop %v719
        %v724 = vsub.f32 %v696, %v712
        %v725 = vsub.f32 %v697, %v713
        %v726 = vsub.f32 %v698, %v714
        %v727 = vsub.f32 %v699, %v715
        %v728 = vpow.pop %v724
        %v729 = vpow.pop %v725
        %v730 = vpow.pop %v726
        %v731 = vpow.pop %v727
        %v732 = vld [vmem:[#allocation4] sm:$0xff]
        %v733 = vld [vmem:[#allocation4 + $0x8] sm:$0xff]
        %v734 = vld [vmem:[#allocation4 + $0x10] sm:$0xff]
        %v735 = vld [vmem:[#allocation4 + $0x18] sm:$0xff]
        %v736 = vmul.f32 %v720, %v732
        %v737 = vmul.f32 %v721, %v733
        %v738 = vmul.f32 %v722, %v734
        %v739 = vmul.f32 %v723, %v735
        %740 = vadd.xlane.f32.xlu0 %v728
        %v741 = vpop.xlane.xlu0 %740
        %742 = vadd.xlane.f32.xlu0 %v729
        %v743 = vpop.xlane.xlu0 %742
        %744 = vadd.xlane.f32.xlu0 %v730
        %v745 = vpop.xlane.xlu0 %744
        %746 = vadd.xlane.f32.xlu0 %v731
        %v747 = vpop.xlane.xlu0 %746
        %v748 = vadd.f32 %v736, %v741
        %v749 = vadd.f32 %v737, %v743
        %v750 = vadd.f32 %v738, %v745
        %v751 = vadd.f32 %v739, %v747
        %752 = vst [vmem:[#allocation4] sm:$0xff] %v748
        %753 = vst [vmem:[#allocation4 + $0x8] sm:$0xff] %v749
        %754 = vst [vmem:[#allocation4 + $0x10] sm:$0xff] %v750
        %755 = vst [vmem:[#allocation4 + $0x18] sm:$0xff] %v751
        %v756 = vld [vmem:[#allocation5] sm:$0xff]
        %v757 = vld [vmem:[#allocation5 + $0x8] sm:$0xff]
        %v758 = vld [vmem:[#allocation5 + $0x10] sm:$0xff]
        %v759 = vld [vmem:[#allocation5 + $0x18] sm:$0xff]
        %v760 = vmul.f32 %v720, %v756
        %v761 = vmul.f32 %v721, %v757
        %v762 = vmul.f32 %v722, %v758
        %v763 = vmul.f32 %v723, %v759
        %v764 = vpack.c.bf16 %v728, %v728
        %v765 = vpack.c.bf16 %v729, %v729
        %v766 = vpack.c.bf16 %v730, %v730
        %v767 = vpack.c.bf16 %v731, %v731
        %v768 = vld [vmem:[%s282] sm:$0xff]
        %v769 = vld [vmem:[%s282 + $0x8] sm:$0xff]
        %v770 = vld [vmem:[%s282 + $0x10] sm:$0xff]
        %v771 = vld [vmem:[%s282 + $0x18] sm:$0xff]
        %v772 = vld [vmem:[%s282 + $0x20] sm:$0xff]
        %v773 = vld [vmem:[%s282 + $0x28] sm:$0xff]
        %v774 = vld [vmem:[%s282 + $0x30] sm:$0xff]
        %v775 = vld [vmem:[%s282 + $0x38] sm:$0xff]
        %v776 = vld [vmem:[%s282 + $0x40] sm:$0xff]
        %v777 = vld [vmem:[%s282 + $0x48] sm:$0xff]
        %v778 = vld [vmem:[%s282 + $0x50] sm:$0xff]
        %v779 = vld [vmem:[%s282 + $0x58] sm:$0xff]
        %v780 = vld [vmem:[%s282 + $0x60] sm:$0xff]
        %v781 = vld [vmem:[%s282 + $0x68] sm:$0xff]
        %v782 = vld [vmem:[%s282 + $0x70] sm:$0xff]
        %v783 = vld [vmem:[%s282 + $0x78] sm:$0xff]
        %v784 = vld [vmem:[%s282 + $0x80] sm:$0xff]
        %v785 = vld [vmem:[%s282 + $0x88] sm:$0xff]
        %v786 = vld [vmem:[%s282 + $0x90] sm:$0xff]
        %v787 = vld [vmem:[%s282 + $0x98] sm:$0xff]
        %v788 = vld [vmem:[%s282 + $0xa0] sm:$0xff]
        %v789 = vld [vmem:[%s282 + $0xa8] sm:$0xff]
        %v790 = vld [vmem:[%s282 + $0xb0] sm:$0xff]
        %v791 = vld [vmem:[%s282 + $0xb8] sm:$0xff]
        %v792 = vld [vmem:[%s282 + $0xc0] sm:$0xff]
        %v793 = vld [vmem:[%s282 + $0xc8] sm:$0xff]
        %v794 = vld [vmem:[%s282 + $0xd0] sm:$0xff]
        %v795 = vld [vmem:[%s282 + $0xd8] sm:$0xff]
        %v796 = vld [vmem:[%s282 + $0xe0] sm:$0xff]
        %v797 = vld [vmem:[%s282 + $0xe8] sm:$0xff]
        %v798 = vld [vmem:[%s282 + $0xf0] sm:$0xff]
        %v799 = vld [vmem:[%s282 + $0xf8] sm:$0xff]
        %v800 = vld [vmem:[%s282 + $0x100] sm:$0xff]
        %v801 = vld [vmem:[%s282 + $0x108] sm:$0xff]
        %v802 = vld [vmem:[%s282 + $0x110] sm:$0xff]
        %v803 = vld [vmem:[%s282 + $0x118] sm:$0xff]
        %v804 = vld [vmem:[%s282 + $0x120] sm:$0xff]
        %v805 = vld [vmem:[%s282 + $0x128] sm:$0xff]
        %v806 = vld [vmem:[%s282 + $0x130] sm:$0xff]
        %v807 = vld [vmem:[%s282 + $0x138] sm:$0xff]
        %v808 = vld [vmem:[%s282 + $0x140] sm:$0xff]
        %v809 = vld [vmem:[%s282 + $0x148] sm:$0xff]
        %v810 = vld [vmem:[%s282 + $0x150] sm:$0xff]
        %v811 = vld [vmem:[%s282 + $0x158] sm:$0xff]
        %v812 = vld [vmem:[%s282 + $0x160] sm:$0xff]
        %v813 = vld [vmem:[%s282 + $0x168] sm:$0xff]
        %v814 = vld [vmem:[%s282 + $0x170] sm:$0xff]
        %v815 = vld [vmem:[%s282 + $0x178] sm:$0xff]
        %v816 = vld [vmem:[%s282 + $0x180] sm:$0xff]
        %v817 = vld [vmem:[%s282 + $0x188] sm:$0xff]
        %v818 = vld [vmem:[%s282 + $0x190] sm:$0xff]
        %v819 = vld [vmem:[%s282 + $0x198] sm:$0xff]
        %v820 = vld [vmem:[%s282 + $0x1a0] sm:$0xff]
        %v821 = vld [vmem:[%s282 + $0x1a8] sm:$0xff]
        %v822 = vld [vmem:[%s282 + $0x1b0] sm:$0xff]
        %v823 = vld [vmem:[%s282 + $0x1b8] sm:$0xff]
        %v824 = vld [vmem:[%s282 + $0x1c0] sm:$0xff]
        %v825 = vld [vmem:[%s282 + $0x1c8] sm:$0xff]
        %v826 = vld [vmem:[%s282 + $0x1d0] sm:$0xff]
        %v827 = vld [vmem:[%s282 + $0x1d8] sm:$0xff]
        %v828 = vld [vmem:[%s282 + $0x1e0] sm:$0xff]
        %v829 = vld [vmem:[%s282 + $0x1e8] sm:$0xff]
        %v830 = vld [vmem:[%s282 + $0x1f0] sm:$0xff]
        %v831 = vld [vmem:[%s282 + $0x1f8] sm:$0xff]
        %v832 = vpack.c.bf16 %v769, %v768
        %v833 = vpack.c.bf16 %v771, %v770
        %v834 = vpack.c.bf16 %v773, %v772
        %v835 = vpack.c.bf16 %v775, %v774
        %v836 = vpack.c.bf16 %v777, %v776
        %v837 = vpack.c.bf16 %v779, %v778
        %v838 = vpack.c.bf16 %v781, %v780
        %v839 = vpack.c.bf16 %v783, %v782
        %v840 = vpack.c.bf16 %v785, %v784
        %v841 = vpack.c.bf16 %v787, %v786
        %v842 = vpack.c.bf16 %v789, %v788
        %v843 = vpack.c.bf16 %v791, %v790
        %v844 = vpack.c.bf16 %v793, %v792
        %v845 = vpack.c.bf16 %v795, %v794
        %v846 = vpack.c.bf16 %v797, %v796
        %v847 = vpack.c.bf16 %v799, %v798
        %v848 = vpack.c.bf16 %v801, %v800
        %v849 = vpack.c.bf16 %v803, %v802
        %v850 = vpack.c.bf16 %v805, %v804
        %v851 = vpack.c.bf16 %v807, %v806
        %v852 = vpack.c.bf16 %v809, %v808
        %v853 = vpack.c.bf16 %v811, %v810
        %v854 = vpack.c.bf16 %v813, %v812
        %v855 = vpack.c.bf16 %v815, %v814
        %v856 = vpack.c.bf16 %v817, %v816
        %v857 = vpack.c.bf16 %v819, %v818
        %v858 = vpack.c.bf16 %v821, %v820
        %v859 = vpack.c.bf16 %v823, %v822
        %v860 = vpack.c.bf16 %v825, %v824
        %v861 = vpack.c.bf16 %v827, %v826
        %v862 = vpack.c.bf16 %v829, %v828
        %v863 = vpack.c.bf16 %v831, %v830
        %864 = vmatprep.subr.bf16.mxu0 0
        %865 = vmatpush1.bf16.msra.mxu0 %v832
        %866 = vmatprep.subr.bf16.mxu0 0
        %867 = vmatpush1.bf16.msra.mxu0 %v833
        %868 = vmatprep.subr.bf16.mxu0 0
        %869 = vmatpush1.bf16.msra.mxu0 %v834
        %870 = vmatprep.subr.bf16.mxu0 0
        %871 = vmatpush1.bf16.msra.mxu0 %v835
        %872 = vmatprep.subr.bf16.mxu0 0
        %873 = vmatpush1.bf16.msra.mxu0 %v836
        %874 = vmatprep.subr.bf16.mxu0 0
        %875 = vmatpush1.bf16.msra.mxu0 %v837
        %876 = vmatprep.subr.bf16.mxu0 0
        %877 = vmatpush1.bf16.msra.mxu0 %v838
        %878 = vmatprep.subr.bf16.mxu0 0
        %879 = vmatpush1.bf16.msra.mxu0 %v839
        %880 = vmatprep.subr.bf16.mxu0 0
        %881 = vmatpush1.bf16.msra.mxu0 0
        %882 = vmatprep.subr.bf16.mxu0 0
        %883 = vmatpush1.bf16.msra.mxu0 0
        %884 = vmatprep.subr.bf16.mxu0 0
        %885 = vmatpush1.bf16.msra.mxu0 0
        %886 = vmatprep.subr.bf16.mxu0 0
        %887 = vmatpush1.bf16.msra.mxu0 0
        %888 = vmatprep.subr.bf16.mxu0 0
        %889 = vmatpush1.bf16.msra.mxu0 0
        %890 = vmatprep.subr.bf16.mxu0 0
        %891 = vmatpush1.bf16.msra.mxu0 0
        %892 = vmatprep.subr.bf16.mxu0 0
        %893 = vmatpush1.bf16.msra.mxu0 0
        %894 = vmatprep.subr.bf16.mxu0 0
        %895 = vmatpush1.bf16.msra.mxu0 0
        %896 = vmatprep.mubr.bf16.mxu0 0
        %897 = vmatmul.mubr.bf16.gmra.mrb[0].mxu0 %v764
        %v898 = vpop.f32.mrb[0].mxu0
        %v899 = vadd.f32 0.0, %v898
        %v900 = vpop.f32.mrb[0].mxu0
        %v901 = vpop.f32.mrb[0].mxu0
        %v902 = vpop.f32.mrb[0].mxu0
        %903 = vdwg.mxu0
        %904 = vmatprep.subr.bf16.mxu0 0
        %905 = vmatpush1.bf16.msra.mxu0 %v840
        %906 = vmatprep.subr.bf16.mxu0 0
        %907 = vmatpush1.bf16.msra.mxu0 %v841
        %908 = vmatprep.subr.bf16.mxu0 0
        %909 = vmatpush1.bf16.msra.mxu0 %v842
        %910 = vmatprep.subr.bf16.mxu0 0
        %911 = vmatpush1.bf16.msra.mxu0 %v843
        %912 = vmatprep.subr.bf16.mxu0 0
        %913 = vmatpush1.bf16.msra.mxu0 %v844
        %914 = vmatprep.subr.bf16.mxu0 0
        %915 = vmatpush1.bf16.msra.mxu0 %v845
        %916 = vmatprep.subr.bf16.mxu0 0
        %917 = vmatpush1.bf16.msra.mxu0 %v846
        %918 = vmatprep.subr.bf16.mxu0 0
        %919 = vmatpush1.bf16.msra.mxu0 %v847
        %920 = vmatprep.subr.bf16.mxu0 0
        %921 = vmatpush1.bf16.msra.mxu0 0
        %922 = vmatprep.subr.bf16.mxu0 0
        %923 = vmatpush1.bf16.msra.mxu0 0
        %924 = vmatprep.subr.bf16.mxu0 0
        %925 = vmatpush1.bf16.msra.mxu0 0
        %926 = vmatprep.subr.bf16.mxu0 0
        %927 = vmatpush1.bf16.msra.mxu0 0
        %928 = vmatprep.subr.bf16.mxu0 0
        %929 = vmatpush1.bf16.msra.mxu0 0
        %930 = vmatprep.subr.bf16.mxu0 0
        %931 = vmatpush1.bf16.msra.mxu0 0
        %932 = vmatprep.subr.bf16.mxu0 0
        %933 = vmatpush1.bf16.msra.mxu0 0
        %934 = vmatprep.subr.bf16.mxu0 0
        %935 = vmatpush1.bf16.msra.mxu0 0
        %936 = vmatprep.mubr.bf16.mxu0 0
        %937 = vmatmul.mubr.bf16.gmra.mrb[0].mxu0 %v765
        %v938 = vpop.f32.mrb[0].mxu0
        %v939 = vadd.f32 0.0, %v938
        %v940 = vpop.f32.mrb[0].mxu0
        %v941 = vpop.f32.mrb[0].mxu0
        %v942 = vpop.f32.mrb[0].mxu0
        %943 = vdwg.mxu0
        %944 = vmatprep.subr.bf16.mxu0 0
        %945 = vmatpush1.bf16.msra.mxu0 %v848
        %946 = vmatprep.subr.bf16.mxu0 0
        %947 = vmatpush1.bf16.msra.mxu0 %v849
        %948 = vmatprep.subr.bf16.mxu0 0
        %949 = vmatpush1.bf16.msra.mxu0 %v850
        %950 = vmatprep.subr.bf16.mxu0 0
        %951 = vmatpush1.bf16.msra.mxu0 %v851
        %952 = vmatprep.subr.bf16.mxu0 0
        %953 = vmatpush1.bf16.msra.mxu0 %v852
        %954 = vmatprep.subr.bf16.mxu0 0
        %955 = vmatpush1.bf16.msra.mxu0 %v853
        %956 = vmatprep.subr.bf16.mxu0 0
        %957 = vmatpush1.bf16.msra.mxu0 %v854
        %958 = vmatprep.subr.bf16.mxu0 0
        %959 = vmatpush1.bf16.msra.mxu0 %v855
        %960 = vmatprep.subr.bf16.mxu0 0
        %961 = vmatpush1.bf16.msra.mxu0 0
        %962 = vmatprep.subr.bf16.mxu0 0
        %963 = vmatpush1.bf16.msra.mxu0 0
        %964 = vmatprep.subr.bf16.mxu0 0
        %965 = vmatpush1.bf16.msra.mxu0 0
        %966 = vmatprep.subr.bf16.mxu0 0
        %967 = vmatpush1.bf16.msra.mxu0 0
        %968 = vmatprep.subr.bf16.mxu0 0
        %969 = vmatpush1.bf16.msra.mxu0 0
        %970 = vmatprep.subr.bf16.mxu0 0
        %971 = vmatpush1.bf16.msra.mxu0 0
        %972 = vmatprep.subr.bf16.mxu0 0
        %973 = vmatpush1.bf16.msra.mxu0 0
        %974 = vmatprep.subr.bf16.mxu0 0
        %975 = vmatpush1.bf16.msra.mxu0 0
        %976 = vmatprep.mubr.bf16.mxu0 0
        %977 = vmatmul.mubr.bf16.gmra.mrb[0].mxu0 %v766
        %v978 = vpop.f32.mrb[0].mxu0
        %v979 = vadd.f32 0.0, %v978
        %v980 = vpop.f32.mrb[0].mxu0
        %v981 = vpop.f32.mrb[0].mxu0
        %v982 = vpop.f32.mrb[0].mxu0
        %983 = vdwg.mxu0
        %984 = vmatprep.subr.bf16.mxu0 0
        %985 = vmatpush1.bf16.msra.mxu0 %v856
        %986 = vmatprep.subr.bf16.mxu0 0
        %987 = vmatpush1.bf16.msra.mxu0 %v857
        %988 = vmatprep.subr.bf16.mxu0 0
        %989 = vmatpush1.bf16.msra.mxu0 %v858
        %990 = vmatprep.subr.bf16.mxu0 0
        %991 = vmatpush1.bf16.msra.mxu0 %v859
        %992 = vmatprep.subr.bf16.mxu0 0
        %993 = vmatpush1.bf16.msra.mxu0 %v860
        %994 = vmatprep.subr.bf16.mxu0 0
        %995 = vmatpush1.bf16.msra.mxu0 %v861
        %996 = vmatprep.subr.bf16.mxu0 0
        %997 = vmatpush1.bf16.msra.mxu0 %v862
        %998 = vmatprep.subr.bf16.mxu0 0
        %999 = vmatpush1.bf16.msra.mxu0 %v863
        %1000 = vmatprep.subr.bf16.mxu0 0
        %1001 = vmatpush1.bf16.msra.mxu0 0
        %1002 = vmatprep.subr.bf16.mxu0 0
        %1003 = vmatpush1.bf16.msra.mxu0 0
        %1004 = vmatprep.subr.bf16.mxu0 0
        %1005 = vmatpush1.bf16.msra.mxu0 0
        %1006 = vmatprep.subr.bf16.mxu0 0
        %1007 = vmatpush1.bf16.msra.mxu0 0
        %1008 = vmatprep.subr.bf16.mxu0 0
        %1009 = vmatpush1.bf16.msra.mxu0 0
        %1010 = vmatprep.subr.bf16.mxu0 0
        %1011 = vmatpush1.bf16.msra.mxu0 0
        %1012 = vmatprep.subr.bf16.mxu0 0
        %1013 = vmatpush1.bf16.msra.mxu0 0
        %1014 = vmatprep.subr.bf16.mxu0 0
        %1015 = vmatpush1.bf16.msra.mxu0 0
        %1016 = vmatprep.mubr.bf16.mxu0 0
        %1017 = vmatmul.mubr.bf16.gmra.mrb[0].mxu0 %v767
        %v1018 = vpop.f32.mrb[0].mxu0
        %v1019 = vadd.f32 0.0, %v1018
        %v1020 = vpop.f32.mrb[0].mxu0
        %v1021 = vpop.f32.mrb[0].mxu0
        %v1022 = vpop.f32.mrb[0].mxu0
        %1023 = vdwg.mxu0
        %v1024 = vadd.f32 %v760, %v899
        %v1025 = vadd.f32 %v761, %v939
        %v1026 = vadd.f32 %v762, %v979
        %v1027 = vadd.f32 %v763, %v1019
        %1028 = vst.msk [vmem:[#allocation5] sm:$0xff] %vm421, %v1024
        %1029 = vst.msk [vmem:[#allocation5 + $0x8] sm:$0xff] %vm421, %v1025
        %1030 = vst.msk [vmem:[#allocation5 + $0x10] sm:$0xff] %vm421, %v1026
        %1031 = vst.msk [vmem:[#allocation5 + $0x18] sm:$0xff] %vm421, %v1027
        %1032 = vst [vmem:[#allocation3] sm:$0xff] %v712
        %1033 = vst [vmem:[#allocation3 + $0x8] sm:$0xff] %v713
        %1034 = vst [vmem:[#allocation3 + $0x10] sm:$0xff] %v714
        %1035 = vst [vmem:[#allocation3 + $0x18] sm:$0xff] %v715
        // Predicated region
        $region37: #{tpu_custom_call.1} parent=31 // pred_check
          %p1036 = pneg %p287
        $region38: #{tpu_custom_call.1} parent=31 // pred_check_branch
          %1038 = sbr.rel (%p1036) target = $region40
        $region39: #{tpu_custom_call.1} parent=31 // pred_region
          %v1039 = vld [vmem:[#allocation4] sm:$0xff]
          %v1040 = vld [vmem:[#allocation4 + $0x8] sm:$0xff]
          %v1041 = vld [vmem:[#allocation4 + $0x10] sm:$0xff]
          %v1042 = vld [vmem:[#allocation4 + $0x18] sm:$0xff]
          %v1043 = vrcp.pop %v1039
          %v1044 = vrcp.pop %v1040
          %v1045 = vrcp.pop %v1041
          %v1046 = vrcp.pop %v1042
          %v1047 = vld [vmem:[#allocation5] sm:$0xff]
          %v1048 = vld [vmem:[#allocation5 + $0x8] sm:$0xff]
          %v1049 = vld [vmem:[#allocation5 + $0x10] sm:$0xff]
          %v1050 = vld [vmem:[#allocation5 + $0x18] sm:$0xff]
          %v1051 = vmul.f32 %v1047, %v1043
          %v1052 = vmul.f32 %v1048, %v1044
          %v1053 = vmul.f32 %v1049, %v1045
          %v1054 = vmul.f32 %v1050, %v1046
          %1055 = vst.msk [vmem:[%s251] sm:$0xff] %vm421, %v1051
          %1056 = vst.msk [vmem:[%s251 + $0x8] sm:$0xff] %vm421, %v1052
          %1057 = vst.msk [vmem:[%s251 + $0x10] sm:$0xff] %vm421, %v1053
          %1058 = vst.msk [vmem:[%s251 + $0x18] sm:$0xff] %vm421, %v1054
        $region40: #{tpu_custom_call.1} parent=31 // pred_fallthru
          _
        %s1059 = sand.u32 %s130, 1
        %s1060 = scalar_lea.sflag [#allocation7], %s1059
        %s1061 = sand.u32 %s130, 1
        %s1062 = smul.addr %s1061, 32
        %s1063 = scalar_lea.vmem [#allocation6], %s1062
        // Predicated region
        $region41: #{tpu_custom_call.1} parent=31 // pred_check
          %p1064 = pneg %p140
        $region42: #{tpu_custom_call.1} parent=31 // pred_check_branch
          %1066 = sbr.rel (%p1064) target = $region44
        $region43: #{tpu_custom_call.1} parent=31 // pred_region
          %s1067 = smul.u32 4, %s22
          %s1069 = ssub.s32 512, 512
          %1070 = vsyncadd %s1060, %s1069
          %s1071 = sadd.s32 %s23, %s1067
          %s1072 = smul.addr %s1071, 128
          %s1073 = scalar_lea.hbm %s3, %s1072
          %s1074 = sshll.u32 %s1063, 4
          %s1075 = int_to_ptr.vmem [resolvable:$true] %s1074
          %1080 = dma.vmem_to_hbm [thread:$0]  %s1075, 512, %s1073, %s1060, 128, 128, 8
        $region44: #{tpu_custom_call.1} parent=31 // pred_fallthru
          _
      $region32: #{tpu_custom_call.1} parent=5 // pred_fallthru
        _
      %p1081 = scmp.le.s32.totalorder 2, %s12
      // Predicated region
      $region45: #{tpu_custom_call.1} parent=5 // pred_check
        %p1082 = pneg %p1081
      $region46: #{tpu_custom_call.1} parent=5 // pred_check_branch
        %1084 = sbr.rel (%p1082) target = $region48
      $region47: #{tpu_custom_call.1} parent=5 // pred_region
        %s1085 = ssub.s32 %s12, 2
        // Predicated region
        $region49: #{tpu_custom_call.1} parent=47 // pred_check
          %p1086 = pneg %p146
        $region50: #{tpu_custom_call.1} parent=47 // pred_check_branch
          %1088 = sbr.rel (%p1086) target = $region52
        $region51: #{tpu_custom_call.1} parent=47 // pred_region
          %s1089 = sand.u32 %s131, 1
          %s1090 = scalar_lea.sflag [#allocation7], %s1089
          %s1091 = sand.u32 %s131, 1
          %s1092 = smul.addr %s1091, 32
          %s1093 = scalar_lea.vmem [#allocation6], %s1092
          %1094 = dma.done %s1090, 512
        $region52: #{tpu_custom_call.1} parent=47 // pred_fallthru
          _
      $region48: #{tpu_custom_call.1} parent=5 // pred_fallthru
        _
    $region6: #{tpu_custom_call.1} parent=1 // loop_footer
      %s16 = sadd.s32 1, %s12
    $region7: #{tpu_custom_call.1} parent=1 // loop_footer_branch
      %11 = sbr.rel target = $region3
    $region8: #{tpu_custom_call.1} parent=1 // loop_exit
      _
    %1095 = vsyncpa [#allocation7], 1
    %s1096 = scalar_lea.sflag [#allocation7], 1
    %1097 = vsyncpa %s1096, 1

</llo_original>
